<compile_context>
chip_gen: v7x
topology: tpu7x:2x2x1
jax: 0.10.0
libtpu: 0.0.40
codegen_flags: <defaults>
</compile_context>

<pallas_src>
import jax
import jax.numpy as jnp
from jax.experimental import pallas as pl
from jax.experimental.pallas import tpu as pltpu


def _gaussian_basis_kernel(dist_ref, offset_ref, neg_temps_ref, out_ref):
    # dist_ref:      (1, TN)  distances for this tile of edges (lane axis)
    # offset_ref:    (G, 1)   gaussian centers (sublane axis), grid-resident
    # neg_temps_ref: (G, 1)   -|temps| precomputed in wrapper, grid-resident
    # out_ref:       (G, TN)  lane-dense output tile
    d = dist_ref[...] - offset_ref[...]                 # broadcast -> (G, TN)
    out_ref[...] = jnp.exp(d * d * neg_temps_ref[...]).astype(out_ref.dtype)


def gaussian_basis(dist, offset, temps, *, tile_n=2048, out_dtype=jnp.float32):
    """dist: [N], offset/temps: [G] -> [N, G] (out_dtype, default f32)."""
    n = dist.shape[0]
    g = offset.shape[0]

    # Edge-tile width: multiple of 128, no larger than needed for small N.
    tile_n = int(max(128, min(int(tile_n), pl.cdiv(n, 128) * 128)))
    n_pad = pl.cdiv(n, tile_n) * tile_n

    dist2d = jnp.pad(dist.astype(jnp.float32), (0, n_pad - n)).reshape(1, n_pad)
    offset2d = offset.reshape(g, 1).astype(jnp.float32)
    neg_temps2d = (-jnp.abs(temps)).reshape(g, 1).astype(jnp.float32)

    grid = (n_pad // tile_n,)
    out_gn = pl.pallas_call(
        _gaussian_basis_kernel,
        out_shape=jax.ShapeDtypeStruct((g, n_pad), out_dtype),
        grid_spec=pltpu.PrefetchScalarGridSpec(
            num_scalar_prefetch=0,
            grid=grid,
            in_specs=[
                pl.BlockSpec((1, tile_n), lambda i: (0, i)),   # dist tile
                pl.BlockSpec((g, 1), lambda i: (0, 0)),        # offset (resident)
                pl.BlockSpec((g, 1), lambda i: (0, 0)),        # -|temps| (resident)
            ],
            out_specs=pl.BlockSpec((g, tile_n), lambda i: (0, i)),
        ),
        compiler_params=pltpu.CompilerParams(
            dimension_semantics=("parallel",),
        ),
    )(dist2d, offset2d, neg_temps2d)

    # Module semantics: [N, G]. Drop edge padding and flip back.
    return out_gn[:, :n].T


def make_params(start=0.0, stop=5.0, num_gaussians=50):
    # Deterministic, matching nn.Module __init__ with trainable=False,
    # trainable_stds=False.
    offset = jnp.linspace(start, stop, num_gaussians, dtype=jnp.float32)
    temp = 0.5 / ((stop - start) / (num_gaussians - 1)) ** 2
    temps = jnp.full((num_gaussians,), temp, dtype=jnp.float32)
    return offset, temps


def reference(dist, offset, temps):
    d = dist[:, None] - offset[None, :]
    return jnp.exp(d * d * (-jnp.abs(temps[None, :])))


if __name__ == "__main__":
    key = jax.random.PRNGKey(0)
    num_edges = 200          # deliberately NOT a multiple of the tile width
    start, stop, num_gaussians = 0.0, 5.0, 50

    dist = jax.random.uniform(key, (num_edges,), dtype=jnp.float32,
                              minval=start, maxval=stop)
    offset, temps = make_params(start, stop, num_gaussians)

    out = gaussian_basis(dist, offset, temps)
    out = jax.block_until_ready(out)

    ref = reference(dist, offset, temps)
    assert out.shape == (num_edges, num_gaussians)
    assert jnp.allclose(out, ref, atol=1e-5, rtol=1e-5), "mismatch vs reference"

    print("KERNEL_OK")
</pallas_src>

<mosaic_0001>
module attributes {stable_mosaic.version = 11 : i64} {
  func.func @_gaussian_basis_kernel(%arg0: i32, %arg1: memref<1x256xf32, #tpu.memory_space<vmem>>, %arg2: memref<50x1xf32, #tpu.memory_space<vmem>>, %arg3: memref<50x1xf32, #tpu.memory_space<vmem>>, %arg4: memref<50x256xf32, #tpu.memory_space<vmem>>) attributes {dimension_semantics = [#tpu.dimension_semantics<parallel>], iteration_bounds = array<i64: 1>, scalar_prefetch = 0 : i64, scratch_operands = 0 : i64, tpu.core_type = #tpu.core_type<tc>, window_params = [{transform_indices = @transform_0, window_bounds = array<i64: 1, 256>}, {pipeline_mode = #tpu.pipeline_mode<synchronous>, transform_indices = @transform_1, window_bounds = array<i64: 50, 1>}, {pipeline_mode = #tpu.pipeline_mode<synchronous>, transform_indices = @transform_2, window_bounds = array<i64: 50, 1>}, {transform_indices = @transform_3, window_bounds = array<i64: 50, 256>}]} {
    %c0 = arith.constant 0 : index
    %c0_0 = arith.constant 0 : index
    %0 = vector.load %arg1[%c0, %c0_0] : memref<1x256xf32, #tpu.memory_space<vmem>>, vector<1x256xf32>
    %c0_1 = arith.constant 0 : index
    %c0_2 = arith.constant 0 : index
    %1 = vector.load %arg2[%c0_1, %c0_2] : memref<50x1xf32, #tpu.memory_space<vmem>>, vector<50x1xf32>
    %2 = vector.broadcast %0 : vector<1x256xf32> to vector<50x256xf32>
    %3 = vector.broadcast %1 : vector<50x1xf32> to vector<50x256xf32>
    %4 = arith.subf %2, %3 : vector<50x256xf32>
    %5 = arith.mulf %4, %4 : vector<50x256xf32>
    %c0_3 = arith.constant 0 : index
    %c0_4 = arith.constant 0 : index
    %6 = vector.load %arg3[%c0_3, %c0_4] : memref<50x1xf32, #tpu.memory_space<vmem>>, vector<50x1xf32>
    %7 = vector.broadcast %6 : vector<50x1xf32> to vector<50x256xf32>
    %8 = arith.mulf %5, %7 : vector<50x256xf32>
    %9 = math.exp %8 : vector<50x256xf32>
    %c0_5 = arith.constant 0 : index
    %c0_6 = arith.constant 0 : index
    %10 = vector.load %arg4[%c0_5, %c0_6] : memref<50x256xf32, #tpu.memory_space<vmem>>, vector<50x256xf32>
    tpu.vector_store %arg4[%c0_5, %c0_6], %9 {strides = array<i32>} : memref<50x256xf32, #tpu.memory_space<vmem>>, vector<50x256xf32>,
    return
  }
  func.func @transform_0(%arg0: i32) -> (i32, i32) {
    %c0_i32 = arith.constant 0 : i32
    %c0_i32_0 = arith.constant 0 : i32
    return %c0_i32, %arg0 : i32, i32
  }
  func.func @transform_1(%arg0: i32) -> (i32, i32) {
    %c0_i32 = arith.constant 0 : i32
    %c0_i32_0 = arith.constant 0 : i32
    %c0_i32_1 = arith.constant 0 : i32
    return %c0_i32, %c0_i32_0 : i32, i32
  }
  func.func @transform_2(%arg0: i32) -> (i32, i32) {
    %c0_i32 = arith.constant 0 : i32
    %c0_i32_0 = arith.constant 0 : i32
    %c0_i32_1 = arith.constant 0 : i32
    return %c0_i32, %c0_i32_0 : i32, i32
  }
  func.func @transform_3(%arg0: i32) -> (i32, i32) {
    %c0_i32 = arith.constant 0 : i32
    %c0_i32_0 = arith.constant 0 : i32
    return %c0_i32, %arg0 : i32, i32
  }
}

</mosaic_0001>

<llo_original>
// kernel: tpu_custom_call.1
$region0: #{tpu_custom_call.1}
  #allocation0 [shape = 'u32[]', space=smem, size = 0x4, offset = 0x4, fixed_abs, tag = 'smem constant byte address 0x4 - core index']
  #allocation1 [shape = 'u32[144,128]{1,0:T(1,128)}', space=vmem, size = 0x12000, scoped, tag = 'internal scratch']
  %s0 = inlined_call_operand.vmem [shape: f32[1,256], index: 0, kind: input, shape index: {}]
  %s1 = inlined_call_operand.vmem [shape: f32[50,1], index: 1, kind: input, shape index: {}]
  %s2 = inlined_call_operand.vmem [shape: f32[50,1], index: 2, kind: input, shape index: {}]
  %s3 = inlined_call_operand.hbm [shape: f32[50,256], index: 3, kind: output, shape index: {}]
  %s4 = sld [smem:[#allocation0]]
  $region22: #{tpu_custom_call.1} parent=0
    _
  %s6 = ssub.s32 1, %s4
  %s7 = scalar_select 0, %s6, %s4
  $region1: #{tpu_custom_call.1} parent=0
    #allocation2 [shape = 'u8[57344]{0}', space=vmem, size = 0xe000, scoped, tag = 'output window, operand 0, single buffered']
    #allocation3 [shape = 's32[1]{0}', space=sflag, size = 0x4, scoped, tag = 'scoped memory for tpu_custom_call.1']
    %8 = vsyncpa [#allocation3], 0
    // Predicated region
    $region2: #{tpu_custom_call.1} parent=1 // pred_check
      _
    $region3: #{tpu_custom_call.1} parent=1 // pred_check_branch
      %10 = sbr.rel (0) target = $region5
    $region4: #{tpu_custom_call.1} parent=1 // pred_region
      _
    $region5: #{tpu_custom_call.1} parent=1 // pred_fallthru
      _
    // Predicated region
    $region6: #{tpu_custom_call.1} parent=1 // pred_check
      _
    $region7: #{tpu_custom_call.1} parent=1 // pred_check_branch
      %12 = sbr.rel (0) target = $region9
    $region8: #{tpu_custom_call.1} parent=1 // pred_region
      _
    $region9: #{tpu_custom_call.1} parent=1 // pred_fallthru
      _
    // Predicated region
    $region10: #{tpu_custom_call.1} parent=1 // pred_check
      _
    $region11: #{tpu_custom_call.1} parent=1 // pred_check_branch
      %14 = sbr.rel (0) target = $region13
    $region12: #{tpu_custom_call.1} parent=1 // pred_region
      _
    $region13: #{tpu_custom_call.1} parent=1 // pred_fallthru
      _
    %v15 = vld [vmem:[%s0] sm:$0x3]
    %v16 = vld [vmem:[%s1] sm:$0xff]
    %v17 = vld [vmem:[%s1 + $0x8] sm:$0xff]
    %v18 = vld [vmem:[%s1 + $0x10] sm:$0xff]
    %v19 = vld [vmem:[%s1 + $0x18] sm:$0xff]
    %v20 = vld [vmem:[%s1 + $0x20] sm:$0xff]
    %v21 = vld [vmem:[%s1 + $0x28] sm:$0xff]
    %v22 = vld [vmem:[%s1 + $0x30] sm:$0x3]
    %v24 = vlaneseq
    %v25 = vshrl.u32 %v24, 7
    %v26 = vsub.s32 0, %v25
    %v27 = vrot.slane %v15, %v26
    %v28 = vlaneseq
    %v29 = vshrl.u32 %v28, 7
    %v30 = vsub.s32 1, %v29
    %v31 = vrot.slane %v15, %v30
    %35 = vset.pattern.permute.xlu0 0
    %36 = vperm.xlu0 %35, %v16
    %v37 = vpop.permute.xlu0 %36
    %40 = vset.pattern.permute.xlu0 0
    %41 = vperm.xlu0 %40, %v17
    %v42 = vpop.permute.xlu0 %41
    %45 = vset.pattern.permute.xlu0 0
    %46 = vperm.xlu0 %45, %v18
    %v47 = vpop.permute.xlu0 %46
    %50 = vset.pattern.permute.xlu0 0
    %51 = vperm.xlu0 %50, %v19
    %v52 = vpop.permute.xlu0 %51
    %55 = vset.pattern.permute.xlu0 0
    %56 = vperm.xlu0 %55, %v20
    %v57 = vpop.permute.xlu0 %56
    %60 = vset.pattern.permute.xlu0 0
    %61 = vperm.xlu0 %60, %v21
    %v62 = vpop.permute.xlu0 %61
    %65 = vset.pattern.permute.xlu0 0
    %66 = vperm.xlu0 %65, %v22
    %v67 = vpop.permute.xlu0 %66
    %v69 = vsub.f32 %v27, %v37
    %v70 = vsub.f32 %v31, %v37
    %v71 = vsub.f32 %v27, %v42
    %v72 = vsub.f32 %v31, %v42
    %v73 = vsub.f32 %v27, %v47
    %v74 = vsub.f32 %v31, %v47
    %v75 = vsub.f32 %v27, %v52
    %v76 = vsub.f32 %v31, %v52
    %v77 = vsub.f32 %v27, %v57
    %v78 = vsub.f32 %v31, %v57
    %v79 = vsub.f32 %v27, %v62
    %v80 = vsub.f32 %v31, %v62
    %v81 = vsub.f32 %v27, %v67
    %v82 = vsub.f32 %v31, %v67
    %v83 = vmul.f32 %v69, %v69
    %v84 = vmul.f32 %v70, %v70
    %v85 = vmul.f32 %v71, %v71
    %v86 = vmul.f32 %v72, %v72
    %v87 = vmul.f32 %v73, %v73
    %v88 = vmul.f32 %v74, %v74
    %v89 = vmul.f32 %v75, %v75
    %v90 = vmul.f32 %v76, %v76
    %v91 = vmul.f32 %v77, %v77
    %v92 = vmul.f32 %v78, %v78
    %v93 = vmul.f32 %v79, %v79
    %v94 = vmul.f32 %v80, %v80
    %v95 = vmul.f32 %v81, %v81
    %v96 = vmul.f32 %v82, %v82
    %v97 = vld [vmem:[%s2] sm:$0xff]
    %v98 = vld [vmem:[%s2 + $0x8] sm:$0xff]
    %v99 = vld [vmem:[%s2 + $0x10] sm:$0xff]
    %v100 = vld [vmem:[%s2 + $0x18] sm:$0xff]
    %v101 = vld [vmem:[%s2 + $0x20] sm:$0xff]
    %v102 = vld [vmem:[%s2 + $0x28] sm:$0xff]
    %v103 = vld [vmem:[%s2 + $0x30] sm:$0x3]
    %105 = vset.pattern.permute.xlu0 0
    %106 = vperm.xlu0 %105, %v97
    %v107 = vpop.permute.xlu0 %106
    %110 = vset.pattern.permute.xlu0 0
    %111 = vperm.xlu0 %110, %v98
    %v112 = vpop.permute.xlu0 %111
    %115 = vset.pattern.permute.xlu0 0
    %116 = vperm.xlu0 %115, %v99
    %v117 = vpop.permute.xlu0 %116
    %120 = vset.pattern.permute.xlu0 0
    %121 = vperm.xlu0 %120, %v100
    %v122 = vpop.permute.xlu0 %121
    %125 = vset.pattern.permute.xlu0 0
    %126 = vperm.xlu0 %125, %v101
    %v127 = vpop.permute.xlu0 %126
    %130 = vset.pattern.permute.xlu0 0
    %131 = vperm.xlu0 %130, %v102
    %v132 = vpop.permute.xlu0 %131
    %135 = vset.pattern.permute.xlu0 0
    %136 = vperm.xlu0 %135, %v103
    %v137 = vpop.permute.xlu0 %136
    %v139 = vmul.f32 %v83, %v107
    %v140 = vmul.f32 %v84, %v107
    %v141 = vmul.f32 %v85, %v112
    %v142 = vmul.f32 %v86, %v112
    %v143 = vmul.f32 %v87, %v117
    %v144 = vmul.f32 %v88, %v117
    %v145 = vmul.f32 %v89, %v122
    %v146 = vmul.f32 %v90, %v122
    %v147 = vmul.f32 %v91, %v127
    %v148 = vmul.f32 %v92, %v127
    %v149 = vmul.f32 %v93, %v132
    %v150 = vmul.f32 %v94, %v132
    %v151 = vmul.f32 %v95, %v137
    %v152 = vmul.f32 %v96, %v137
    %v153 = vmul.f32 %v139, 1.442695
    %v154 = vpow.pop %v153
    %v155 = vmul.f32 %v140, 1.442695
    %v156 = vpow.pop %v155
    %v157 = vmul.f32 %v141, 1.442695
    %v158 = vpow.pop %v157
    %v159 = vmul.f32 %v142, 1.442695
    %v160 = vpow.pop %v159
    %v161 = vmul.f32 %v143, 1.442695
    %v162 = vpow.pop %v161
    %v163 = vmul.f32 %v144, 1.442695
    %v164 = vpow.pop %v163
    %v165 = vmul.f32 %v145, 1.442695
    %v166 = vpow.pop %v165
    %v167 = vmul.f32 %v146, 1.442695
    %v168 = vpow.pop %v167
    %v169 = vmul.f32 %v147, 1.442695
    %v170 = vpow.pop %v169
    %v171 = vmul.f32 %v148, 1.442695
    %v172 = vpow.pop %v171
    %v173 = vmul.f32 %v149, 1.442695
    %v174 = vpow.pop %v173
    %v175 = vmul.f32 %v150, 1.442695
    %v176 = vpow.pop %v175
    %v177 = vmul.f32 %v151, 1.442695
    %v178 = vpow.pop %v177
    %v179 = vmul.f32 %v152, 1.442695
    %v180 = vpow.pop %v179
    %181 = vst [vmem:[#allocation2] sm:$0xff] %v154
    %182 = vst [vmem:[#allocation2 + $0x8] sm:$0xff] %v156
    %183 = vst [vmem:[#allocation2 + $0x10] sm:$0xff] %v158
    %184 = vst [vmem:[#allocation2 + $0x18] sm:$0xff] %v160
    %185 = vst [vmem:[#allocation2 + $0x20] sm:$0xff] %v162
    %186 = vst [vmem:[#allocation2 + $0x28] sm:$0xff] %v164
    %187 = vst [vmem:[#allocation2 + $0x30] sm:$0xff] %v166
    %188 = vst [vmem:[#allocation2 + $0x38] sm:$0xff] %v168
    %189 = vst [vmem:[#allocation2 + $0x40] sm:$0xff] %v170
    %190 = vst [vmem:[#allocation2 + $0x48] sm:$0xff] %v172
    %191 = vst [vmem:[#allocation2 + $0x50] sm:$0xff] %v174
    %192 = vst [vmem:[#allocation2 + $0x58] sm:$0xff] %v176
    %193 = vst [vmem:[#allocation2 + $0x60] sm:$0x3] %v178
    %194 = vst [vmem:[#allocation2 + $0x68] sm:$0x3] %v180
    // Predicated region
    $region14: #{tpu_custom_call.1} parent=1 // pred_check
      _
    $region15: #{tpu_custom_call.1} parent=1 // pred_check_branch
      %196 = sbr.rel (0) target = $region17
    $region16: #{tpu_custom_call.1} parent=1 // pred_region
      %s198 = ssub.s32 1792, 1792
      %199 = vsyncadd [#allocation3], %s198
      %s200 = sshll.u32 [#allocation2], 4
      %s201 = int_to_ptr.vmem [resolvable:$true] %s200
      %206 = dma.vmem_to_hbm [thread:$0]  %s201, 1792, %s3, [#allocation3], 256, 256, 16
    $region17: #{tpu_custom_call.1} parent=1 // pred_fallthru
      _
    // Predicated region
    $region18: #{tpu_custom_call.1} parent=1 // pred_check
      _
    $region19: #{tpu_custom_call.1} parent=1 // pred_check_branch
      %208 = sbr.rel (0) target = $region21
    $region20: #{tpu_custom_call.1} parent=1 // pred_region
      %209 = dma.done [#allocation3], 1792
    $region21: #{tpu_custom_call.1} parent=1 // pred_fallthru
      _
    %210 = vsyncpa [#allocation3], 1

</llo_original>
